<compile_context>
chip_gen: v5e
topology: v5e:2x2
jax: 0.10.0
libtpu: 0.0.40
codegen_flags: <defaults>
</compile_context>

<pallas_src>
import jax
import jax.numpy as jnp
from jax.experimental import pallas as pl
from jax.experimental.pallas import tpu as pltpu

_FALLBACK_BYTES = 256 << 10  # below this total HBM traffic, plain XLA elementwise wins


def _round_up(a, b):
    return ((a + b - 1) // b) * b


def _sublane(dtype):
    # Sublane packing multiple: 8 for f32, 16 for bf16, 32 for 8-bit types.
    return max(8, 32 // jnp.dtype(dtype).itemsize)


def _tpu_params():
    """(target x-block bytes per grid step, tensorcores per chip, VMEM capacity)."""
    target = 4 << 20          # >= ~85% of HBM roofline on v5e/v6e per measured tile curve
    cores = 1
    vmem_cap = 128 << 20
    try:
        info = pltpu.get_tpu_info()
        vmem_cap = int(getattr(info, "vmem_capacity_bytes", vmem_cap))
    except Exception:
        pass
    try:
        kind = jax.devices()[0].device_kind.lower()
    except Exception:
        kind = ""
    if "v7" in kind or vmem_cap <= (64 << 20):
        # v7x: 3.2 TB/s HBM (bigger blocks amortize the ~0.35us/step tax), 2 TCs,
        # but only 64 MiB VMEM per core.
        target = 6 << 20
        cores = 2
    return target, cores, vmem_cap


def _pick_spatial_tile(hw, c_pad, itemsize, target_bytes):
    """Full HW if one item's padded (C, HW) slab fits the budget; otherwise the
    largest multiple of 128 that does (edge block masked via a cdiv grid)."""
    if c_pad * _round_up(hw, 128) * itemsize <= target_bytes:
        return hw
    thw = (target_bytes // (c_pad * itemsize)) // 128 * 128
    return max(128, min(thw, hw))


def _pick_batch_tile(n, per_item_bytes, target_bytes, spatial_steps, prefer_even_steps):
    """Largest divisor of n under the padded block budget.

    Prefers batch tiles whose 2-D noise block is layout-legal (tn == N or 8-aligned);
    on 2-TC chips prefers an even total number of parallel grid steps."""
    divisors = [d for d in range(1, n + 1) if n % d == 0]
    fitting = [d for d in divisors if d * per_item_bytes <= target_bytes] or [1]
    friendly = [d for d in fitting if d == n or d % 8 == 0]
    pool = friendly or fitting
    best = max(pool)
    if prefer_even_steps:
        even = [d for d in pool if ((n // d) * spatial_steps) % 2 == 0]
        if even:
            best = max(even)
    return best, (best == n or best % 8 == 0)


def _inject_noise_kernel(w_ref, x_ref, n_ref, o_ref):
    # w_ref : (C, 1)          per-channel scale, resident across all grid steps
    # x_ref : (tn, C, thw)    activation tile
    # n_ref : (tn, thw)       lane-dense noise tile  (or (tn, 1, thw) fallback layout)
    # o_ref : (tn, C, thw)
    w = w_ref[...].astype(jnp.float32)            # (C, 1)
    x = x_ref[...].astype(jnp.float32)            # (tn, C, thw)
    n = n_ref[...].astype(jnp.float32)            # in-kernel cast: no extra HBM pass
    if n.ndim == 2:                               # static (trace-time) layout switch
        n = n[:, None, :]
    o_ref[...] = (x + w[None, :, :] * n).astype(o_ref.dtype)


def inject_noise(x, weight, noise=None, *, key=None, force_pallas=False, donate_x=False):
    """x: (N, C, H, W); weight: (1, C, 1, 1); noise: (N, 1, H, W) (drawn from `key` if None)."""
    N, C, H, W = x.shape
    if noise is None:
        if key is None:
            raise ValueError("pass either `noise` or a PRNG `key`")
        noise = jax.random.normal(key, (N, 1, H, W), dtype=jnp.float32)
    # TODO(synk): optional in-kernel noise generation (pltpu.prng_seed +
    # pltpu.prng_random_bits) would remove the noise HBM read entirely, at the
    # cost of bit-exactness vs this external reference path.  Likewise, adjacent
    # elementwise neighbors (bias + LeakyReLU) should be fused here when this
    # kernel is used inside the full StyleGAN block.

    HW = H * W
    out_dtype = jnp.result_type(x.dtype, weight.dtype, noise.dtype)
    x_item = jnp.dtype(x.dtype).itemsize
    o_item = jnp.dtype(out_dtype).itemsize
    n_item = jnp.dtype(noise.dtype).itemsize
    w_item = jnp.dtype(weight.dtype).itemsize

    total_bytes = x.size * (x_item + o_item) + noise.size * n_item
    if not force_pallas and total_bytes < _FALLBACK_BYTES:
        # Dispatch + pipeline fixed cost dominates at this size; let XLA fuse it.
        r = x.astype(jnp.float32) + weight.astype(jnp.float32) * noise.astype(jnp.float32)
        return r.astype(out_dtype)

    target, cores, vmem_cap = _tpu_params()
    c_pad = _round_up(C, _sublane(x.dtype))

    thw = _pick_spatial_tile(HW, c_pad, max(x_item, o_item), target)
    thw_pad = _round_up(thw, 128)
    spatial_steps = pl.cdiv(HW, thw)
    per_item_bytes = c_pad * thw_pad * max(x_item, o_item)
    tn, noise_2d = _pick_batch_tile(N, per_item_bytes, target, spatial_steps,
                                    prefer_even_steps=(cores >= 2))

    x_flat = x.reshape(N, C, HW)
    w_flat = weight.reshape(C, 1)
    if noise_2d:
        noise_flat = noise.reshape(N, HW)
        noise_spec = pl.BlockSpec((tn, thw), lambda n, h: (n, h))
    else:
        noise_flat = noise.reshape(N, 1, HW)
        noise_spec = pl.BlockSpec((tn, 1, thw), lambda n, h: (n, 0, h))

    # Padded, double-buffered VMEM footprint -> explicit scoped-VMEM limit.
    n_sub = _sublane(noise.dtype)
    x_blk = tn * c_pad * thw_pad * x_item
    o_blk = tn * c_pad * thw_pad * o_item
    n_blk = (_round_up(tn, n_sub) if noise_2d else tn * n_sub) * thw_pad * n_item
    w_blk = _round_up(C, _sublane(weight.dtype)) * 128 * w_item
    footprint = 2 * (x_blk + o_blk + n_blk + w_blk)
    vmem_limit = int(min(max(footprint + footprint // 4 + (2 << 20), 8 << 20), vmem_cap))

    kwargs = {}
    if donate_x:
        # Only when the caller no longer needs x: reuse its HBM buffer for the output.
        kwargs["input_output_aliases"] = {1: 0}

    out = pl.pallas_call(
        _inject_noise_kernel,
        out_shape=jax.ShapeDtypeStruct((N, C, HW), out_dtype),
        grid_spec=pltpu.PrefetchScalarGridSpec(
            num_scalar_prefetch=0,
            grid=(N // tn, spatial_steps),
            in_specs=[
                pl.BlockSpec((C, 1), lambda n, h: (0, 0)),           # weight: resident, DMA'd once
                pl.BlockSpec((tn, C, thw), lambda n, h: (n, 0, h)),  # x tile
                noise_spec,                                          # noise tile
            ],
            out_specs=pl.BlockSpec((tn, C, thw), lambda n, h: (n, 0, h)),
        ),
        compiler_params=pltpu.CompilerParams(
            dimension_semantics=("parallel", "parallel"),
            vmem_limit_bytes=vmem_limit,
        ),
        **kwargs,
    )(w_flat, x_flat, noise_flat)

    return out.reshape(N, C, H, W)


def _check(key, N, C, H, W, force_pallas):
    kx, kw, kn = jax.random.split(key, 3)
    x = jax.random.normal(kx, (N, C, H, W), dtype=jnp.float32)
    # PyTorch init is zeros; use small non-zero weights to exercise the MAD path.
    weight = 0.1 * jax.random.normal(kw, (1, C, 1, 1), dtype=jnp.float32)
    noise = jax.random.normal(kn, (N, 1, H, W), dtype=jnp.float32)

    out = inject_noise(x, weight, noise, force_pallas=force_pallas)
    jax.block_until_ready(out)

    ref = x + weight * noise
    assert out.shape == (N, C, H, W)
    assert jnp.allclose(out, ref, atol=1e-6, rtol=1e-6), (N, C, H, W, force_pallas)


if __name__ == "__main__":
    key = jax.random.PRNGKey(0)
    k0, k1, k2 = jax.random.split(key, 3)

    # Module-spec shape (N=2, C=4, 16x16), forced through the Pallas kernel.
    _check(k0, N=2, C=4, H=16, W=16, force_pallas=True)
    # Same shape via the auto path (takes the small-size plain-JAX fallback).
    _check(k0, N=2, C=4, H=16, W=16, force_pallas=False)
    # Lane-aligned config (HW = 9*128) exercising the batch-tiled 2-D noise path.
    _check(k1, N=4, C=8, H=32, W=36, force_pallas=True)
    # Non-128-aligned spatial extent (full-extent lane-dim block path).
    _check(k2, N=2, C=8, H=10, W=10, force_pallas=True)

    print("KERNEL_OK")
</pallas_src>

<mosaic_0001>
module attributes {stable_mosaic.version = 11 : i64} {
  func.func @_inject_noise_kernel(%arg0: i32, %arg1: i32, %arg2: memref<4x1xf32, #tpu.memory_space<vmem>>, %arg3: memref<2x4x256xf32, #tpu.memory_space<vmem>>, %arg4: memref<2x256xf32, #tpu.memory_space<vmem>>, %arg5: memref<2x4x256xf32, #tpu.memory_space<vmem>>) attributes {dimension_semantics = [#tpu.dimension_semantics<parallel>, #tpu.dimension_semantics<parallel>], iteration_bounds = array<i64: 1, 1>, scalar_prefetch = 0 : i64, scratch_operands = 0 : i64, tpu.core_type = #tpu.core_type<tc>, window_params = [{pipeline_mode = #tpu.pipeline_mode<synchronous>, transform_indices = @transform_0, window_bounds = array<i64: 4, 1>}, {transform_indices = @transform_1, window_bounds = array<i64: 2, 4, 256>}, {transform_indices = @transform_2, window_bounds = array<i64: 2, 256>}, {transform_indices = @transform_3, window_bounds = array<i64: 2, 4, 256>}]} {
    %c0 = arith.constant 0 : index
    %c0_0 = arith.constant 0 : index
    %0 = vector.load %arg2[%c0, %c0_0] : memref<4x1xf32, #tpu.memory_space<vmem>>, vector<4x1xf32>
    %c0_1 = arith.constant 0 : index
    %c0_2 = arith.constant 0 : index
    %c0_3 = arith.constant 0 : index
    %1 = vector.load %arg3[%c0_1, %c0_2, %c0_3] : memref<2x4x256xf32, #tpu.memory_space<vmem>>, vector<2x4x256xf32>
    %c0_4 = arith.constant 0 : index
    %c0_5 = arith.constant 0 : index
    %2 = vector.load %arg4[%c0_4, %c0_5] : memref<2x256xf32, #tpu.memory_space<vmem>>, vector<2x256xf32>
    %3 = vector.shape_cast %2 : vector<2x256xf32> to vector<2x1x256xf32>
    %4 = vector.shape_cast %0 : vector<4x1xf32> to vector<1x4x1xf32>
    %5 = vector.broadcast %4 : vector<1x4x1xf32> to vector<2x4x256xf32>
    %6 = vector.broadcast %3 : vector<2x1x256xf32> to vector<2x4x256xf32>
    %7 = arith.mulf %5, %6 : vector<2x4x256xf32>
    %8 = arith.addf %1, %7 : vector<2x4x256xf32>
    %c0_6 = arith.constant 0 : index
    %c0_7 = arith.constant 0 : index
    %c0_8 = arith.constant 0 : index
    %9 = vector.load %arg5[%c0_6, %c0_7, %c0_8] : memref<2x4x256xf32, #tpu.memory_space<vmem>>, vector<2x4x256xf32>
    tpu.vector_store %arg5[%c0_6, %c0_7, %c0_8], %8 {strides = array<i32>} : memref<2x4x256xf32, #tpu.memory_space<vmem>>, vector<2x4x256xf32>,
    return
  }
  func.func @transform_0(%arg0: i32, %arg1: i32) -> (i32, i32) {
    %c0_i32 = arith.constant 0 : i32
    %c0_i32_0 = arith.constant 0 : i32
    %c0_i32_1 = arith.constant 0 : i32
    return %c0_i32, %c0_i32_0 : i32, i32
  }
  func.func @transform_1(%arg0: i32, %arg1: i32) -> (i32, i32, i32) {
    %c0_i32 = arith.constant 0 : i32
    %c0_i32_0 = arith.constant 0 : i32
    return %arg0, %c0_i32, %arg1 : i32, i32, i32
  }
  func.func @transform_2(%arg0: i32, %arg1: i32) -> (i32, i32) {
    %c0_i32 = arith.constant 0 : i32
    return %arg0, %arg1 : i32, i32
  }
  func.func @transform_3(%arg0: i32, %arg1: i32) -> (i32, i32, i32) {
    %c0_i32 = arith.constant 0 : i32
    %c0_i32_0 = arith.constant 0 : i32
    return %arg0, %c0_i32, %arg1 : i32, i32, i32
  }
}

</mosaic_0001>

<llo_original>
// kernel: tpu_custom_call.1
$region0: #{tpu_custom_call.1}
  #allocation0 [shape = 'u32[]', space=smem, size = 0x4, offset = 0x4, fixed_abs, tag = 'smem constant byte address 0x4 - core index']
  #allocation1 [shape = 'u32[72,128]{1,0:T(1,128)}', space=vmem, size = 0x9000, scoped, tag = 'internal scratch']
  %s0 = inlined_call_operand.vmem [shape: f32[4,1], index: 0, kind: input, shape index: {}]
  %s1 = inlined_call_operand.hbm [shape: f32[2,4,256], index: 1, kind: input, shape index: {}]
  %s2 = inlined_call_operand.vmem [shape: f32[2,256], index: 2, kind: input, shape index: {}]
  %s3 = inlined_call_operand.hbm [shape: f32[2,4,256], index: 3, kind: output, shape index: {}]
  %s4 = sld [smem:[#allocation0]]
  $region26: #{tpu_custom_call.1} parent=0
    _
  %s6 = ssub.s32 1, %s4
  %s7 = scalar_select 0, %s6, %s4
  $region1: #{tpu_custom_call.1} parent=0
    #allocation2 [shape = 'u8[8192]{0}', space=vmem, size = 0x2000, scoped, tag = 'input window, operand 1, single buffered']
    #allocation3 [shape = 's32[1]{0}', space=sflag, size = 0x4, scoped, tag = 'scoped memory for tpu_custom_call.1']
    #allocation4 [shape = 's32[1]{0}', space=sflag, size = 0x4, scoped, tag = 'scoped memory for tpu_custom_call.1']
    #allocation5 [shape = 'u8[8192]{0}', space=vmem, size = 0x2000, scoped, tag = 'output window, operand 0, single buffered']
    %8 = vsyncpa [#allocation3], 0
    %9 = vsyncpa [#allocation4], 0
    // Predicated region
    $region2: #{tpu_custom_call.1} parent=1 // pred_check
      _
    $region3: #{tpu_custom_call.1} parent=1 // pred_check_branch
      %11 = sbr.rel (0) target = $region5
    $region4: #{tpu_custom_call.1} parent=1 // pred_region
      _
    $region5: #{tpu_custom_call.1} parent=1 // pred_fallthru
      _
    // Predicated region
    $region6: #{tpu_custom_call.1} parent=1 // pred_check
      _
    $region7: #{tpu_custom_call.1} parent=1 // pred_check_branch
      %13 = sbr.rel (0) target = $region9
    $region8: #{tpu_custom_call.1} parent=1 // pred_region
      %15 = vsyncadd [#allocation3], 0
      %s16 = sshll.u32 %s1, 4
      %s17 = int_to_ptr.hbm [resolvable:$true] %s16
      %s18 = sshll.u32 [#allocation2], 4
      %s19 = int_to_ptr.vmem [resolvable:$true] %s18
      %24 = dma.hbm_to_vmem [thread:$0]  %s17, 256, %s19, [#allocation3], 128, 128, 8
    $region9: #{tpu_custom_call.1} parent=1 // pred_fallthru
      _
    // Predicated region
    $region10: #{tpu_custom_call.1} parent=1 // pred_check
      _
    $region11: #{tpu_custom_call.1} parent=1 // pred_check_branch
      %26 = sbr.rel (0) target = $region13
    $region12: #{tpu_custom_call.1} parent=1 // pred_region
      _
    $region13: #{tpu_custom_call.1} parent=1 // pred_fallthru
      _
    // Predicated region
    $region14: #{tpu_custom_call.1} parent=1 // pred_check
      _
    $region15: #{tpu_custom_call.1} parent=1 // pred_check_branch
      %28 = sbr.rel (0) target = $region17
    $region16: #{tpu_custom_call.1} parent=1 // pred_region
      %30 = dma.done [#allocation3], 256
    $region17: #{tpu_custom_call.1} parent=1 // pred_fallthru
      _
    %v31 = vld [vmem:[%s0] sm:$0xf]
    %v32 = vld [vmem:[#allocation2] sm:$0xff]
    %v33 = vld [vmem:[#allocation2 + $0x8] sm:$0xff]
    %v34 = vld [vmem:[%s2] sm:$0xf]
    %v36 = vrot.slane %v34, 1
    %v37 = vrot.slane %v34, 2
    %v38 = vrot.slane %v34, 3
    %vm39 = vcmask 1040384
    %v40 = vsel %vm39, %v34, %v36
    %vm41 = vcmask 1042434
    %v42 = vsel %vm41, %v37, %v38
    %vm43 = vcmask 1041408
    %v44 = vsel %vm43, %v40, %v42
    %vm45 = vcmask 1041409
    %v46 = vsel %vm45, %v34, %v36
    %vm47 = vcmask 1043459
    %v48 = vsel %vm47, %v37, %v38
    %vm49 = vcmask 1042433
    %v50 = vsel %vm49, %v46, %v48
    %v51 = vrot.slane %v50, 1
    %53 = vset.pattern.permute.xlu0 0
    %54 = vperm.xlu0 %53, %v31
    %v55 = vpop.permute.xlu0 %54
    %v57 = vperm.slane %v44, 0
    %v58 = vperm.slane %v44, 1
    %v59 = vperm.slane %v51, 0
    %v60 = vperm.slane %v51, 1
    %v65 = vmul.f32 %v55, %v57
    %v66 = vmul.f32 %v55, %v58
    %v67 = vmul.f32 %v55, %v59
    %v68 = vmul.f32 %v55, %v60
    %v73 = vrot.slane %v66, 4
    %v74 = vrot.slane %v68, 4
    %vm75 = vcmask 1043456
    %v76 = vsel %vm75, %v65, %v73
    %v77 = vsel %vm75, %v67, %v74
    %v80 = vadd.f32 %v32, %v76
    %v81 = vadd.f32 %v33, %v77
    %82 = vst [vmem:[#allocation5] sm:$0xff] %v80
    %83 = vst [vmem:[#allocation5 + $0x8] sm:$0xff] %v81
    // Predicated region
    $region18: #{tpu_custom_call.1} parent=1 // pred_check
      _
    $region19: #{tpu_custom_call.1} parent=1 // pred_check_branch
      %85 = sbr.rel (0) target = $region21
    $region20: #{tpu_custom_call.1} parent=1 // pred_region
      %87 = vsyncadd [#allocation4], 0
      %s88 = sshll.u32 [#allocation5], 4
      %s89 = int_to_ptr.vmem [resolvable:$true] %s88
      %s90 = sshll.u32 %s3, 4
      %s91 = int_to_ptr.hbm [resolvable:$true] %s90
      %96 = dma.vmem_to_hbm [thread:$0]  %s89, 256, %s91, [#allocation4], 128, 128, 8
    $region21: #{tpu_custom_call.1} parent=1 // pred_fallthru
      _
    // Predicated region
    $region22: #{tpu_custom_call.1} parent=1 // pred_check
      _
    $region23: #{tpu_custom_call.1} parent=1 // pred_check_branch
      %98 = sbr.rel (0) target = $region25
    $region24: #{tpu_custom_call.1} parent=1 // pred_region
      %100 = dma.done [#allocation4], 256
    $region25: #{tpu_custom_call.1} parent=1 // pred_fallthru
      _
    %101 = vsyncpa [#allocation3], 1
    %102 = vsyncpa [#allocation4], 1

</llo_original>
